<compile_context>
chip_gen: v7x
topology: tpu7x:2x2x1
jax: 0.10.0
libtpu: 0.0.40
codegen_flags: <defaults>
</compile_context>

<pallas_src>
import jax
import jax.numpy as jnp
from jax.experimental import pallas as pl
from jax.experimental.pallas import tpu as pltpu

_LANES = 128
_SUBLANES = 8
_CHUNK = _SUBLANES * _LANES          # 1024 elements = one (8, 128) vreg group

# ~4 MiB input blocks: measured streaming adds reach ~85-90% of the HBM
# roofline at 1-4 MiB, and the fixed ~0.35 us/step overhead shrinks as the
# block grows.  Scaled by the input dtype so bf16/int8 inputs also hit the
# byte target.
_TARGET_BLOCK_BYTES = 4 * 1024 * 1024


def _make_sum_kernel(group_tile: int, n_groups: int, needs_mask: bool):
    """Streaming sum over (group_tile, 8, 128) blocks into a resident (8,128)
    f32 accumulator.

    `needs_mask` is True iff n_groups % group_tile != 0, i.e. iff the final
    block's DMA reads past the end of the array along dim 0 (Pallas edge
    block: out-of-range rows are undefined).  The mask below is exactly what
    makes those undefined rows harmless — keep the two coupled.
    """

    def sum_kernel(x_ref, o_ref):
        i = pl.program_id(0)

        @pl.when(i == 0)
        def _init():
            o_ref[...] = jnp.zeros_like(o_ref)

        # Per-tile cast in-kernel (VPU op hidden under the DMA); input stays
        # in its native dtype in HBM.
        x = x_ref[...].astype(jnp.float32)

        if needs_mask:
            is_last = i == pl.num_programs(0) - 1

            @pl.when(is_last)
            def _tail():
                # Zero the rows of the (partial) last block that lie past
                # n_groups; only this one step pays the iota/cmp/select cost.
                g_ids = i * group_tile + jax.lax.broadcasted_iota(
                    jnp.int32, x.shape, 0)
                xm = jnp.where(g_ids < n_groups, x, 0.0)
                o_ref[...] += jnp.sum(xm, axis=0)[None, :, :]

            @pl.when(jnp.logical_not(is_last))
            def _body():
                o_ref[...] += jnp.sum(x, axis=0)[None, :, :]
        else:
            # Fold (group_tile, 8, 128) -> (8, 128) with pure VPU adds; the
            # single cross-lane/sublane reduce happens once, in the wrapper.
            o_ref[...] += jnp.sum(x, axis=0)[None, :, :]

    return sum_kernel


def pallas_mean(x: jax.Array,
                *,
                group_tile: int | None = None,
                min_pallas_elems: int = _CHUNK) -> jax.Array:
    """Global mean of x computed with a Pallas TPU streaming reduction."""
    n = x.size
    flat = x.reshape(-1)                       # free reshape; native dtype

    # Small / empty inputs: plain XLA reduce (handles n == 0 -> NaN like
    # jnp.mean / torch.mean). Launch overhead of pallas_call dominates here.
    if n < max(min_pallas_elems, _CHUNK):
        return jnp.mean(flat, dtype=jnp.float32) if n else jnp.float32(jnp.nan)

    itemsize = jnp.dtype(x.dtype).itemsize

    # Feed only the 1024-divisible prefix to the kernel; the remainder is a
    # tiny wrapper-side sum (NO jnp.pad full-array copy).
    n_groups = n // _CHUNK
    n_full = n_groups * _CHUNK
    body = flat[:n_full].reshape(n_groups, _SUBLANES, _LANES)  # lane-dense

    if group_tile is None:
        group_tile = _TARGET_BLOCK_BYTES // (_CHUNK * itemsize)
    group_tile = max(1, min(group_tile, n_groups))
    total_tiles = -(-n_groups // group_tile)
    needs_mask = (total_tiles * group_tile) != n_groups

    # 2 x double-buffered input block + accumulator + headroom; explicit so
    # v5e's 16 MiB default scoped VMEM never silently shrinks the buffering.
    block_bytes = group_tile * _CHUNK * itemsize
    vmem_limit = int(min(64 << 20, max(16 << 20, 2 * block_bytes + (2 << 20))))

    kernel = _make_sum_kernel(group_tile, n_groups, needs_mask)

    partial = pl.pallas_call(
        kernel,
        out_shape=jax.ShapeDtypeStruct((1, _SUBLANES, _LANES), jnp.float32),
        grid_spec=pltpu.PrefetchScalarGridSpec(
            num_scalar_prefetch=0,
            grid=(total_tiles,),
            in_specs=[pl.BlockSpec((group_tile, _SUBLANES, _LANES),
                                   lambda i: (i, 0, 0))],
            out_specs=pl.BlockSpec((1, _SUBLANES, _LANES),
                                   lambda i: (0, 0, 0)),
        ),
        compiler_params=pltpu.CompilerParams(
            dimension_semantics=("arbitrary",),
            vmem_limit_bytes=vmem_limit,
        ),
    )(body)

    total = jnp.sum(partial)
    if n_full != n:                            # < 1024-element tail remainder
        total = total + jnp.sum(flat[n_full:].astype(jnp.float32))
    return total / n


class Metric:
    """JAX/Pallas analogue of the abstract Metric base class."""

    def __init__(self, name: str):
        self.name = name
        self._dtype = jnp.float32          # torch.get_default_dtype() analogue
        self._device = jax.devices()[0]    # torch.device('cpu') analogue

    def forward(self, *args, **kwargs):
        raise NotImplementedError


class MeanMetric(Metric):
    """Minimal concrete Metric: returns the global mean of its input."""

    def forward(self, x: jax.Array) -> jax.Array:
        return pallas_mean(x)

    __call__ = forward


if __name__ == "__main__":
    key = jax.random.PRNGKey(0)
    k1, k2, k3 = jax.random.split(key, 3)

    metric = MeanMetric(name="mean")

    # 1) Canonical small NCHW metric input (2048 elems -> single-tile kernel).
    x1 = jax.random.normal(k1, (2, 4, 16, 16), dtype=jnp.float32)
    v1 = jax.block_until_ready(metric(x1))
    assert jnp.allclose(v1, jnp.mean(x1), atol=1e-5, rtol=1e-5), (v1, jnp.mean(x1))

    # 2) Ragged size + small group_tile -> exercises the pl.when-gated tail
    #    mask and the wrapper-side (<1024 element) remainder sum.
    x2 = jax.random.normal(k2, (3, 5, 17, 19), dtype=jnp.float32)
    v2 = jax.block_until_ready(pallas_mean(x2, group_tile=3))
    assert jnp.allclose(v2, jnp.mean(x2), atol=1e-5, rtol=1e-5), (v2, jnp.mean(x2))

    # 3) bf16 input -> per-tile in-kernel cast, f32 accumulation.
    x3 = jax.random.normal(k3, (2, 8, 16, 32), dtype=jnp.bfloat16)
    v3 = jax.block_until_ready(pallas_mean(x3))
    ref3 = jnp.mean(x3.astype(jnp.float32))
    assert jnp.allclose(v3, ref3, atol=1e-2, rtol=1e-2), (v3, ref3)

    print("KERNEL_OK")
</pallas_src>

<mosaic_0001>
module attributes {stable_mosaic.version = 11 : i64} {
  func.func @sum_kernel(%arg0: i32, %arg1: memref<2x8x128xf32, #tpu.memory_space<vmem>>, %arg2: memref<1x8x128xf32, #tpu.memory_space<vmem>>) attributes {dimension_semantics = [#tpu.dimension_semantics<arbitrary>], iteration_bounds = array<i64: 1>, scalar_prefetch = 0 : i64, scratch_operands = 0 : i64, tpu.core_type = #tpu.core_type<tc>, window_params = [{transform_indices = @transform_0, window_bounds = array<i64: 2, 8, 128>}, {pipeline_mode = #tpu.pipeline_mode<synchronous>, transform_indices = @transform_1, window_bounds = array<i64: 1, 8, 128>}]} {
    %c0_i32 = arith.constant 0 : i32
    %0 = arith.cmpi eq, %arg0, %c0_i32 : i32
    %1 = arith.extui %0 : i1 to i32
    %c0_i32_0 = arith.constant 0 : i32
    %2 = arith.cmpi ne, %1, %c0_i32_0 : i32
    scf.if %2 {
      %cst_9 = arith.constant 0.000000e+00 : f32
      %9 = vector.broadcast %cst_9 : f32 to vector<1x8x128xf32>
      %c0_10 = arith.constant 0 : index
      %c0_11 = arith.constant 0 : index
      %c0_12 = arith.constant 0 : index
      %10 = vector.load %arg2[%c0_10, %c0_11, %c0_12] : memref<1x8x128xf32, #tpu.memory_space<vmem>>, vector<1x8x128xf32>
      tpu.vector_store %arg2[%c0_10, %c0_11, %c0_12], %9 {strides = array<i32>} : memref<1x8x128xf32, #tpu.memory_space<vmem>>, vector<1x8x128xf32>,
    } else {
    }
    %c0 = arith.constant 0 : index
    %c0_1 = arith.constant 0 : index
    %c0_2 = arith.constant 0 : index
    %3 = vector.load %arg1[%c0, %c0_1, %c0_2] : memref<2x8x128xf32, #tpu.memory_space<vmem>>, vector<2x8x128xf32>
    %c0_3 = arith.constant 0 : index
    %c0_4 = arith.constant 0 : index
    %c0_5 = arith.constant 0 : index
    %4 = vector.load %arg2[%c0_3, %c0_4, %c0_5] : memref<1x8x128xf32, #tpu.memory_space<vmem>>, vector<1x8x128xf32>
    %cst = arith.constant dense<0.000000e+00> : vector<8x128xf32>
    %5 = vector.multi_reduction <add>, %3, %cst [0] : vector<2x8x128xf32> to vector<8x128xf32>
    %6 = vector.shape_cast %5 : vector<8x128xf32> to vector<1x8x128xf32>
    %7 = arith.addf %4, %6 : vector<1x8x128xf32>
    %c0_6 = arith.constant 0 : index
    %c0_7 = arith.constant 0 : index
    %c0_8 = arith.constant 0 : index
    %8 = vector.load %arg2[%c0_6, %c0_7, %c0_8] : memref<1x8x128xf32, #tpu.memory_space<vmem>>, vector<1x8x128xf32>
    tpu.vector_store %arg2[%c0_6, %c0_7, %c0_8], %7 {strides = array<i32>} : memref<1x8x128xf32, #tpu.memory_space<vmem>>, vector<1x8x128xf32>,
    return
  }
  func.func @transform_0(%arg0: i32) -> (i32, i32, i32) {
    %c0_i32 = arith.constant 0 : i32
    %c0_i32_0 = arith.constant 0 : i32
    %c0_i32_1 = arith.constant 0 : i32
    return %arg0, %c0_i32, %c0_i32_0 : i32, i32, i32
  }
  func.func @transform_1(%arg0: i32) -> (i32, i32, i32) {
    %c0_i32 = arith.constant 0 : i32
    %c0_i32_0 = arith.constant 0 : i32
    %c0_i32_1 = arith.constant 0 : i32
    %c0_i32_2 = arith.constant 0 : i32
    return %c0_i32, %c0_i32_0, %c0_i32_1 : i32, i32, i32
  }
}

</mosaic_0001>

<llo_original>
// kernel: tpu_custom_call.1
$region0: #{tpu_custom_call.1}
  #allocation0 [shape = 'u32[]', space=smem, size = 0x4, offset = 0x4, fixed_abs, tag = 'smem constant byte address 0x4 - core index']
  #allocation1 [shape = 'u32[144,128]{1,0:T(1,128)}', space=vmem, size = 0x12000, scoped, tag = 'internal scratch']
  %s0 = inlined_call_operand.hbm [shape: f32[2,8,128], index: 0, kind: input, shape index: {}]
  %s1 = inlined_call_operand.hbm [shape: f32[1,8,128], index: 1, kind: output, shape index: {}]
  %s2 = sld [smem:[#allocation0]]
  $region22: #{tpu_custom_call.1} parent=0
    _
  %s4 = ssub.s32 1, %s2
  %s5 = scalar_select 0, %s4, %s2
  $region1: #{tpu_custom_call.1} parent=0
    #allocation2 [shape = 'u8[8192]{0}', space=vmem, size = 0x2000, scoped, tag = 'input window, operand 0, single buffered']
    #allocation3 [shape = 's32[1]{0}', space=sflag, size = 0x4, scoped, tag = 'scoped memory for tpu_custom_call.1']
    #allocation4 [shape = 's32[1]{0}', space=sflag, size = 0x4, scoped, tag = 'scoped memory for tpu_custom_call.1']
    #allocation5 [shape = 'u8[4096]{0}', space=vmem, size = 0x1000, scoped, tag = 'output window, operand 0, single buffered']
    %6 = vsyncpa [#allocation3], 0
    %7 = vsyncpa [#allocation4], 0
    // Predicated region
    $region2: #{tpu_custom_call.1} parent=1 // pred_check
      _
    $region3: #{tpu_custom_call.1} parent=1 // pred_check_branch
      %9 = sbr.rel (0) target = $region5
    $region4: #{tpu_custom_call.1} parent=1 // pred_region
      %s11 = ssub.s32 256, 256
      %12 = vsyncadd [#allocation3], %s11
      %s13 = sshll.u32 [#allocation2], 4
      %s14 = int_to_ptr.vmem [resolvable:$true] %s13
      %19 = dma.hbm_to_vmem [thread:$0]  %s0, 256, %s14, [#allocation3], 128, 128, 8
    $region5: #{tpu_custom_call.1} parent=1 // pred_fallthru
      _
    // Predicated region
    $region6: #{tpu_custom_call.1} parent=1 // pred_check
      _
    $region7: #{tpu_custom_call.1} parent=1 // pred_check_branch
      %21 = sbr.rel (0) target = $region9
    $region8: #{tpu_custom_call.1} parent=1 // pred_region
      %22 = dma.done [#allocation3], 256
    $region9: #{tpu_custom_call.1} parent=1 // pred_fallthru
      _
    %p23 = scmp.eq.s32.totalorder 0, 0
    // Predicated region
    $region10: #{tpu_custom_call.1} parent=1 // pred_check
      %p24 = pneg %p23
    $region11: #{tpu_custom_call.1} parent=1 // pred_check_branch
      %26 = sbr.rel (%p24) target = $region13
    $region12: #{tpu_custom_call.1} parent=1 // pred_region
      %27 = vst [vmem:[#allocation5] sm:$0xff] 0.0
    $region13: #{tpu_custom_call.1} parent=1 // pred_fallthru
      _
    %v28 = vld [vmem:[#allocation2] sm:$0xff]
    %v29 = vld [vmem:[#allocation2 + $0x8] sm:$0xff]
    %v30 = vld [vmem:[#allocation5] sm:$0xff]
    %v31 = vadd.f32 %v28, %v29
    %v32 = vadd.f32 %v30, %v31
    %33 = vst [vmem:[#allocation5] sm:$0xff] %v32
    // Predicated region
    $region14: #{tpu_custom_call.1} parent=1 // pred_check
      _
    $region15: #{tpu_custom_call.1} parent=1 // pred_check_branch
      %35 = sbr.rel (0) target = $region17
    $region16: #{tpu_custom_call.1} parent=1 // pred_region
      %s37 = ssub.s32 128, 128
      %38 = vsyncadd [#allocation4], %s37
      %s40 = sshll.u32 [#allocation5], 4
      %s41 = int_to_ptr.vmem [resolvable:$true] %s40
      %43 = dma.vmem_to_hbm [thread:$0]  %s41, 128, %s1, [#allocation4]
    $region17: #{tpu_custom_call.1} parent=1 // pred_fallthru
      _
    // Predicated region
    $region18: #{tpu_custom_call.1} parent=1 // pred_check
      _
    $region19: #{tpu_custom_call.1} parent=1 // pred_check_branch
      %45 = sbr.rel (0) target = $region21
    $region20: #{tpu_custom_call.1} parent=1 // pred_region
      %46 = dma.done [#allocation4], 128
    $region21: #{tpu_custom_call.1} parent=1 // pred_fallthru
      _
    %47 = vsyncpa [#allocation3], 1
    %48 = vsyncpa [#allocation4], 1

</llo_original>
